<compile_context>
chip_gen: v5e
topology: v5e:2x2
jax: 0.10.0
libtpu: 0.0.40
codegen_flags: <defaults>
</compile_context>

<pallas_src>
import functools

import jax
import jax.numpy as jnp
from jax.experimental import pallas as pl
from jax.experimental.pallas import tpu as pltpu

INPUT_DIM = 1
TIME_EMB = 16
HIDDEN = 128
NUM_LAYERS = 3  # net = Lin(17,128) ReLU Lin(128,128) ReLU Lin(128,128) ReLU Lin(128,1)

_TB_MAX = 2048  # max batch tile; weights are VMEM-resident so per-step HBM
                # traffic is tiny and big tiles just amortize per-step overhead.


def _relu(x):
    return jnp.maximum(x, 0.0)


def _round_up(n, m):
    return ((n + m - 1) // m) * m


def scorenet_kernel(
    x_ref, t_ref,
    # time_net params (layer 3 is folded into the first net layer)
    wt1_ref, bt1_ref, wt2_ref, bt2_ref,
    # main net: first layer split into x-part (f32) and fused time-part (bf16)
    w1x_ref, w1t_ref, b1_ref,
    # hidden layers: bf16 weights, f32 biases
    w2_ref, b2_ref, w3_ref, b3_ref,
    # output layer: bf16 (HIDDEN, 1) weight, f32 bias
    w4_ref, b4_ref,
    out_ref,
):
    x = x_ref[...]            # (TB, 1) f32
    t = t_ref[...]            # (TB, 1) f32

    # ---- time_net layers 1-2 (layer 3 folded) ------------------------------
    # Linear(1,16): K=1 -> outer-product broadcast on the VPU (stays f32)
    h = _relu(t * wt1_ref[...] + bt1_ref[...])                          # (TB, 16)
    h = _relu(jnp.dot(h, wt2_ref[...],
                      preferred_element_type=jnp.float32) + bt2_ref[...])

    # ---- net layer 1 on concat([x, temb], axis=1) (17 -> 128) --------------
    # cat + matmul == x @ W1[:1] + temb @ W1[1:]
    # and (h @ Wt3 + bt3) @ W1[1:] == h @ (Wt3 @ W1[1:]) + bt3 @ W1[1:]  (fused)
    z = (x * w1x_ref[...]
         + jnp.dot(h.astype(jnp.bfloat16), w1t_ref[...],
                   preferred_element_type=jnp.float32)
         + b1_ref[...])                                                 # (TB, 128)
    z = _relu(z)

    # ---- hidden layers (128 -> 128), bf16 MXU inputs, f32 accumulation -----
    z = _relu(jnp.dot(z.astype(jnp.bfloat16), w2_ref[...],
                      preferred_element_type=jnp.float32) + b2_ref[...])
    z = _relu(jnp.dot(z.astype(jnp.bfloat16), w3_ref[...],
                      preferred_element_type=jnp.float32) + b3_ref[...])

    # ---- output layer (128 -> 1) on the MXU (frees the XLU slot) -----------
    out_ref[...] = (jnp.dot(z.astype(jnp.bfloat16), w4_ref[...],
                            preferred_element_type=jnp.float32)
                    + b4_ref[...])                                      # (TB, 1)


def _linear_params(key, fan_in, fan_out):
    """Deterministic PyTorch-style init: U(-1/sqrt(fan_in), 1/sqrt(fan_in))."""
    kw, kb = jax.random.split(key)
    bound = 1.0 / jnp.sqrt(jnp.float32(fan_in))
    w = jax.random.uniform(kw, (fan_in, fan_out), jnp.float32, -bound, bound)
    b = jax.random.uniform(kb, (1, fan_out), jnp.float32, -bound, bound)
    return w, b


def init_scorenet_params(seed=0):
    """Returns (kernel_params, reference_params)."""
    keys = jax.random.split(jax.random.PRNGKey(seed), 7)
    # time_net
    wt1, bt1 = _linear_params(keys[0], 1, TIME_EMB)
    wt2, bt2 = _linear_params(keys[1], TIME_EMB, TIME_EMB)
    wt3, bt3 = _linear_params(keys[2], TIME_EMB, TIME_EMB)
    # net
    w1, b1 = _linear_params(keys[3], INPUT_DIM + TIME_EMB, HIDDEN)
    w2, b2 = _linear_params(keys[4], HIDDEN, HIDDEN)
    w3, b3 = _linear_params(keys[5], HIDDEN, HIDDEN)
    w4, b4 = _linear_params(keys[6], HIDDEN, INPUT_DIM)

    # Split first net layer into x rows and time-embedding rows, then fold the
    # final (ReLU-less) time_net layer into the time-embedding part.
    w1x = w1[:INPUT_DIM, :]                       # (1, 128) f32
    w1t = w1[INPUT_DIM:, :]                       # (16, 128)
    w1t_fused = wt3 @ w1t                         # (16, 128)
    b1_fused = b1 + bt3 @ w1t                     # (1, 128)

    kern = dict(
        wt1=wt1, bt1=bt1, wt2=wt2, bt2=bt2,
        w1x=w1x,
        w1t=w1t_fused.astype(jnp.bfloat16), b1=b1_fused,
        w2=w2.astype(jnp.bfloat16), b2=b2,
        w3=w3.astype(jnp.bfloat16), b3=b3,
        w4=w4.astype(jnp.bfloat16), b4=b4,
    )
    ref = dict(wt1=wt1, bt1=bt1, wt2=wt2, bt2=bt2, wt3=wt3, bt3=bt3,
               w1=w1, b1=b1, w2=w2, b2=b2, w3=w3, b3=b3, w4=w4, b4=b4)
    return kern, ref


def _choose_tile(B, tb_max):
    """Pick (batch tile, padded batch).  Small B -> one small tile (latency);
    B > 256 -> at least 2 grid steps (v7x megacore), tiles capped at tb_max."""
    b_al = _round_up(max(B, 1), 8)          # sublane alignment only; M streams
    if b_al <= 256:                         # 8 rows/push, no 256 fill needed.
        return b_al, b_al
    n_tiles = max(2, -(-b_al // tb_max))    # >= 2 so "parallel" uses both TCs
    tb = _round_up(-(-b_al // n_tiles), 8)
    b_pad = _round_up(b_al, tb)
    return tb, b_pad


@functools.partial(jax.jit, static_argnames=("tb_max",))
def scorenet_forward(x, t, params, tb_max=_TB_MAX):
    B = x.shape[0]
    tb, b_pad = _choose_tile(B, tb_max)
    if b_pad != B:
        x = jnp.pad(x, ((0, b_pad - B), (0, 0)))
        t = jnp.pad(t, ((0, b_pad - B), (0, 0)))

    weight_order = ("wt1", "bt1", "wt2", "bt2",
                    "w1x", "w1t", "b1", "w2", "b2", "w3", "b3", "w4", "b4")
    weights = tuple(params[k] for k in weight_order)
    operands = (x, t) + weights

    # Per-tile batch blocks for x/t/out; constant-index (VMEM-resident) weights.
    batch_spec = pl.BlockSpec((tb, 1), lambda i: (i, 0))
    weight_specs = [pl.BlockSpec(w.shape, lambda i: (0, 0)) for w in weights]
    in_specs = [batch_spec, batch_spec] + weight_specs
    out_spec = pl.BlockSpec((tb, 1), lambda i: (i, 0))

    # Scheduling hints.
    flops_per_row = 2 * (1 * TIME_EMB + TIME_EMB * TIME_EMB
                         + (INPUT_DIM + TIME_EMB) * HIDDEN
                         + (NUM_LAYERS - 1) * HIDDEN * HIDDEN
                         + HIDDEN * INPUT_DIM)
    param_bytes = sum(int(w.size) * w.dtype.itemsize for w in weights)
    io_bytes = (int(x.size) + int(t.size) + b_pad * INPUT_DIM) * 4 + param_bytes
    cost = pl.CostEstimate(flops=int(b_pad * flops_per_row),
                           transcendentals=0,
                           bytes_accessed=int(io_bytes))

    out = pl.pallas_call(
        scorenet_kernel,
        out_shape=jax.ShapeDtypeStruct((b_pad, INPUT_DIM), jnp.float32),
        grid=(b_pad // tb,),
        in_specs=in_specs,
        out_specs=out_spec,
        compiler_params=pltpu.CompilerParams(
            dimension_semantics=("parallel",),
            vmem_limit_bytes=32 * 1024 * 1024,
        ),
        cost_estimate=cost,
    )(*operands)

    return out[:B]


def scorenet_reference(x, t, p):
    """Pure-JAX f32 reference of the PyTorch forward (unfused, unquantized)."""
    h = jax.nn.relu(t @ p["wt1"] + p["bt1"])
    h = jax.nn.relu(h @ p["wt2"] + p["bt2"])
    temb = h @ p["wt3"] + p["bt3"]
    cat = jnp.concatenate([x, temb], axis=1)
    z = jax.nn.relu(cat @ p["w1"] + p["b1"])
    z = jax.nn.relu(z @ p["w2"] + p["b2"])
    z = jax.nn.relu(z @ p["w3"] + p["b3"])
    return z @ p["w4"] + p["b4"]


if __name__ == "__main__":
    B = 8
    key = jax.random.PRNGKey(0)
    kx, kt = jax.random.split(key)
    x = jax.random.normal(kx, (B, INPUT_DIM), jnp.float32)
    t = jax.random.uniform(kt, (B, 1), jnp.float32)

    kern_params, ref_params = init_scorenet_params(seed=0)

    out = scorenet_forward(x, t, kern_params)
    out = jax.block_until_ready(out)

    ref = scorenet_reference(x, t, ref_params)
    assert out.shape == (B, INPUT_DIM)
    # bf16 MXU inputs -> looser tolerance vs the f32 reference.
    assert jnp.allclose(out, ref, rtol=5e-2, atol=5e-3), "mismatch vs reference"

    print("KERNEL_OK")
</pallas_src>

<mosaic_0001>
module attributes {stable_mosaic.version = 11 : i64} {
  func.func @scorenet_kernel(%arg0: i32, %arg1: memref<8x1xf32, #tpu.memory_space<vmem>>, %arg2: memref<8x1xf32, #tpu.memory_space<vmem>>, %arg3: memref<1x16xf32, #tpu.memory_space<vmem>>, %arg4: memref<1x16xf32, #tpu.memory_space<vmem>>, %arg5: memref<16x16xf32, #tpu.memory_space<vmem>>, %arg6: memref<1x16xf32, #tpu.memory_space<vmem>>, %arg7: memref<1x128xf32, #tpu.memory_space<vmem>>, %arg8: memref<16x128xbf16, #tpu.memory_space<vmem>>, %arg9: memref<1x128xf32, #tpu.memory_space<vmem>>, %arg10: memref<128x128xbf16, #tpu.memory_space<vmem>>, %arg11: memref<1x128xf32, #tpu.memory_space<vmem>>, %arg12: memref<128x128xbf16, #tpu.memory_space<vmem>>, %arg13: memref<1x128xf32, #tpu.memory_space<vmem>>, %arg14: memref<128x1xbf16, #tpu.memory_space<vmem>>, %arg15: memref<1x1xf32, #tpu.memory_space<vmem>>, %arg16: memref<8x1xf32, #tpu.memory_space<vmem>>) attributes {dimension_semantics = [#tpu.dimension_semantics<parallel>], iteration_bounds = array<i64: 1>, scalar_prefetch = 0 : i64, scratch_operands = 0 : i64, tpu.core_type = #tpu.core_type<tc>, window_params = [{transform_indices = @transform_0, window_bounds = array<i64: 8, 1>}, {transform_indices = @transform_1, window_bounds = array<i64: 8, 1>}, {pipeline_mode = #tpu.pipeline_mode<synchronous>, transform_indices = @transform_2, window_bounds = array<i64: 1, 16>}, {pipeline_mode = #tpu.pipeline_mode<synchronous>, transform_indices = @transform_3, window_bounds = array<i64: 1, 16>}, {pipeline_mode = #tpu.pipeline_mode<synchronous>, transform_indices = @transform_4, window_bounds = array<i64: 16, 16>}, {pipeline_mode = #tpu.pipeline_mode<synchronous>, transform_indices = @transform_5, window_bounds = array<i64: 1, 16>}, {pipeline_mode = #tpu.pipeline_mode<synchronous>, transform_indices = @transform_6, window_bounds = array<i64: 1, 128>}, {pipeline_mode = #tpu.pipeline_mode<synchronous>, transform_indices = @transform_7, window_bounds = array<i64: 16, 128>}, {pipeline_mode = #tpu.pipeline_mode<synchronous>, transform_indices = @transform_8, window_bounds = array<i64: 1, 128>}, {pipeline_mode = #tpu.pipeline_mode<synchronous>, transform_indices = @transform_9, window_bounds = array<i64: 128, 128>}, {pipeline_mode = #tpu.pipeline_mode<synchronous>, transform_indices = @transform_10, window_bounds = array<i64: 1, 128>}, {pipeline_mode = #tpu.pipeline_mode<synchronous>, transform_indices = @transform_11, window_bounds = array<i64: 128, 128>}, {pipeline_mode = #tpu.pipeline_mode<synchronous>, transform_indices = @transform_12, window_bounds = array<i64: 1, 128>}, {pipeline_mode = #tpu.pipeline_mode<synchronous>, transform_indices = @transform_13, window_bounds = array<i64: 128, 1>}, {pipeline_mode = #tpu.pipeline_mode<synchronous>, transform_indices = @transform_14, window_bounds = array<i64: 1, 1>}, {transform_indices = @transform_15, window_bounds = array<i64: 8, 1>}]} {
    %c0 = arith.constant 0 : index
    %c0_0 = arith.constant 0 : index
    %0 = vector.load %arg1[%c0, %c0_0] : memref<8x1xf32, #tpu.memory_space<vmem>>, vector<8x1xf32>
    %c0_1 = arith.constant 0 : index
    %c0_2 = arith.constant 0 : index
    %1 = vector.load %arg2[%c0_1, %c0_2] : memref<8x1xf32, #tpu.memory_space<vmem>>, vector<8x1xf32>
    %c0_3 = arith.constant 0 : index
    %c0_4 = arith.constant 0 : index
    %2 = vector.load %arg3[%c0_3, %c0_4] : memref<1x16xf32, #tpu.memory_space<vmem>>, vector<1x16xf32>
    %3 = vector.broadcast %1 : vector<8x1xf32> to vector<8x16xf32>
    %4 = vector.broadcast %2 : vector<1x16xf32> to vector<8x16xf32>
    %5 = arith.mulf %3, %4 : vector<8x16xf32>
    %c0_5 = arith.constant 0 : index
    %c0_6 = arith.constant 0 : index
    %6 = vector.load %arg4[%c0_5, %c0_6] : memref<1x16xf32, #tpu.memory_space<vmem>>, vector<1x16xf32>
    %7 = vector.broadcast %6 : vector<1x16xf32> to vector<8x16xf32>
    %8 = arith.addf %5, %7 : vector<8x16xf32>
    %cst = arith.constant 0.000000e+00 : f32
    %9 = vector.broadcast %cst : f32 to vector<8x16xf32>
    %10 = arith.maximumf %8, %9 : vector<8x16xf32>
    %c0_7 = arith.constant 0 : index
    %c0_8 = arith.constant 0 : index
    %11 = vector.load %arg5[%c0_7, %c0_8] : memref<16x16xf32, #tpu.memory_space<vmem>>, vector<16x16xf32>
    %cst_9 = arith.constant dense<0.000000e+00> : vector<8x16xf32>
    %12 = tpu.matmul %10, %11, %cst_9 {dimension_numbers = #tpu.dot_dimension_numbers<[1], [0], [0], [1], [0, 0, 1, 1], [], []>} : vector<8x16xf32>, vector<16x16xf32>, vector<8x16xf32> -> vector<8x16xf32>
    %c0_10 = arith.constant 0 : index
    %c0_11 = arith.constant 0 : index
    %13 = vector.load %arg6[%c0_10, %c0_11] : memref<1x16xf32, #tpu.memory_space<vmem>>, vector<1x16xf32>
    %14 = vector.broadcast %13 : vector<1x16xf32> to vector<8x16xf32>
    %15 = arith.addf %12, %14 : vector<8x16xf32>
    %cst_12 = arith.constant 0.000000e+00 : f32
    %16 = vector.broadcast %cst_12 : f32 to vector<8x16xf32>
    %17 = arith.maximumf %15, %16 : vector<8x16xf32>
    %c0_13 = arith.constant 0 : index
    %c0_14 = arith.constant 0 : index
    %18 = vector.load %arg7[%c0_13, %c0_14] : memref<1x128xf32, #tpu.memory_space<vmem>>, vector<1x128xf32>
    %19 = vector.broadcast %0 : vector<8x1xf32> to vector<8x128xf32>
    %20 = vector.broadcast %18 : vector<1x128xf32> to vector<8x128xf32>
    %21 = arith.mulf %19, %20 : vector<8x128xf32>
    %22 = arith.truncf %17 : vector<8x16xf32> to vector<8x16xbf16>
    %c0_15 = arith.constant 0 : index
    %c0_16 = arith.constant 0 : index
    %23 = vector.load %arg8[%c0_15, %c0_16] : memref<16x128xbf16, #tpu.memory_space<vmem>>, vector<16x128xbf16>
    %cst_17 = arith.constant dense<0.000000e+00> : vector<8x128xf32>
    %24 = tpu.matmul %22, %23, %cst_17 {dimension_numbers = #tpu.dot_dimension_numbers<[1], [0], [0], [1], [0, 0, 1, 1], [], []>} : vector<8x16xbf16>, vector<16x128xbf16>, vector<8x128xf32> -> vector<8x128xf32>
    %25 = arith.addf %21, %24 : vector<8x128xf32>
    %c0_18 = arith.constant 0 : index
    %c0_19 = arith.constant 0 : index
    %26 = vector.load %arg9[%c0_18, %c0_19] : memref<1x128xf32, #tpu.memory_space<vmem>>, vector<1x128xf32>
    %27 = vector.broadcast %26 : vector<1x128xf32> to vector<8x128xf32>
    %28 = arith.addf %25, %27 : vector<8x128xf32>
    %cst_20 = arith.constant 0.000000e+00 : f32
    %29 = vector.broadcast %cst_20 : f32 to vector<8x128xf32>
    %30 = arith.maximumf %28, %29 : vector<8x128xf32>
    %31 = arith.truncf %30 : vector<8x128xf32> to vector<8x128xbf16>
    %c0_21 = arith.constant 0 : index
    %c0_22 = arith.constant 0 : index
    %32 = vector.load %arg10[%c0_21, %c0_22] : memref<128x128xbf16, #tpu.memory_space<vmem>>, vector<128x128xbf16>
    %cst_23 = arith.constant dense<0.000000e+00> : vector<8x128xf32>
    %33 = tpu.matmul %31, %32, %cst_23 {dimension_numbers = #tpu.dot_dimension_numbers<[1], [0], [0], [1], [0, 0, 1, 1], [], []>} : vector<8x128xbf16>, vector<128x128xbf16>, vector<8x128xf32> -> vector<8x128xf32>
    %c0_24 = arith.constant 0 : index
    %c0_25 = arith.constant 0 : index
    %34 = vector.load %arg11[%c0_24, %c0_25] : memref<1x128xf32, #tpu.memory_space<vmem>>, vector<1x128xf32>
    %35 = vector.broadcast %34 : vector<1x128xf32> to vector<8x128xf32>
    %36 = arith.addf %33, %35 : vector<8x128xf32>
    %cst_26 = arith.constant 0.000000e+00 : f32
    %37 = vector.broadcast %cst_26 : f32 to vector<8x128xf32>
    %38 = arith.maximumf %36, %37 : vector<8x128xf32>
    %39 = arith.truncf %38 : vector<8x128xf32> to vector<8x128xbf16>
    %c0_27 = arith.constant 0 : index
    %c0_28 = arith.constant 0 : index
    %40 = vector.load %arg12[%c0_27, %c0_28] : memref<128x128xbf16, #tpu.memory_space<vmem>>, vector<128x128xbf16>
    %cst_29 = arith.constant dense<0.000000e+00> : vector<8x128xf32>
    %41 = tpu.matmul %39, %40, %cst_29 {dimension_numbers = #tpu.dot_dimension_numbers<[1], [0], [0], [1], [0, 0, 1, 1], [], []>} : vector<8x128xbf16>, vector<128x128xbf16>, vector<8x128xf32> -> vector<8x128xf32>
    %c0_30 = arith.constant 0 : index
    %c0_31 = arith.constant 0 : index
    %42 = vector.load %arg13[%c0_30, %c0_31] : memref<1x128xf32, #tpu.memory_space<vmem>>, vector<1x128xf32>
    %43 = vector.broadcast %42 : vector<1x128xf32> to vector<8x128xf32>
    %44 = arith.addf %41, %43 : vector<8x128xf32>
    %cst_32 = arith.constant 0.000000e+00 : f32
    %45 = vector.broadcast %cst_32 : f32 to vector<8x128xf32>
    %46 = arith.maximumf %44, %45 : vector<8x128xf32>
    %47 = arith.truncf %46 : vector<8x128xf32> to vector<8x128xbf16>
    %c0_33 = arith.constant 0 : index
    %c0_34 = arith.constant 0 : index
    %48 = vector.load %arg14[%c0_33, %c0_34] : memref<128x1xbf16, #tpu.memory_space<vmem>>, vector<128x1xbf16>
    %cst_35 = arith.constant dense<0.000000e+00> : vector<8x1xf32>
    %49 = tpu.matmul %47, %48, %cst_35 {dimension_numbers = #tpu.dot_dimension_numbers<[1], [0], [0], [1], [0, 0, 1, 1], [], []>} : vector<8x128xbf16>, vector<128x1xbf16>, vector<8x1xf32> -> vector<8x1xf32>
    %c0_36 = arith.constant 0 : index
    %c0_37 = arith.constant 0 : index
    %50 = vector.load %arg15[%c0_36, %c0_37] : memref<1x1xf32, #tpu.memory_space<vmem>>, vector<1x1xf32>
    %51 = vector.broadcast %50 : vector<1x1xf32> to vector<8x1xf32>
    %52 = arith.addf %49, %51 : vector<8x1xf32>
    %c0_38 = arith.constant 0 : index
    %c0_39 = arith.constant 0 : index
    %53 = vector.load %arg16[%c0_38, %c0_39] : memref<8x1xf32, #tpu.memory_space<vmem>>, vector<8x1xf32>
    tpu.vector_store %arg16[%c0_38, %c0_39], %52 {strides = array<i32>} : memref<8x1xf32, #tpu.memory_space<vmem>>, vector<8x1xf32>,
    return
  }
  func.func @transform_0(%arg0: i32) -> (i32, i32) {
    %c0_i32 = arith.constant 0 : i32
    %c0_i32_0 = arith.constant 0 : i32
    return %arg0, %c0_i32 : i32, i32
  }
  func.func @transform_1(%arg0: i32) -> (i32, i32) {
    %c0_i32 = arith.constant 0 : i32
    %c0_i32_0 = arith.constant 0 : i32
    return %arg0, %c0_i32 : i32, i32
  }
  func.func @transform_2(%arg0: i32) -> (i32, i32) {
    %c0_i32 = arith.constant 0 : i32
    %c0_i32_0 = arith.constant 0 : i32
    %c0_i32_1 = arith.constant 0 : i32
    return %c0_i32, %c0_i32_0 : i32, i32
  }
  func.func @transform_3(%arg0: i32) -> (i32, i32) {
    %c0_i32 = arith.constant 0 : i32
    %c0_i32_0 = arith.constant 0 : i32
    %c0_i32_1 = arith.constant 0 : i32
    return %c0_i32, %c0_i32_0 : i32, i32
  }
  func.func @transform_4(%arg0: i32) -> (i32, i32) {
    %c0_i32 = arith.constant 0 : i32
    %c0_i32_0 = arith.constant 0 : i32
    %c0_i32_1 = arith.constant 0 : i32
    return %c0_i32, %c0_i32_0 : i32, i32
  }
  func.func @transform_5(%arg0: i32) -> (i32, i32) {
    %c0_i32 = arith.constant 0 : i32
    %c0_i32_0 = arith.constant 0 : i32
    %c0_i32_1 = arith.constant 0 : i32
    return %c0_i32, %c0_i32_0 : i32, i32
  }
  func.func @transform_6(%arg0: i32) -> (i32, i32) {
    %c0_i32 = arith.constant 0 : i32
    %c0_i32_0 = arith.constant 0 : i32
    %c0_i32_1 = arith.constant 0 : i32
    return %c0_i32, %c0_i32_0 : i32, i32
  }
  func.func @transform_7(%arg0: i32) -> (i32, i32) {
    %c0_i32 = arith.constant 0 : i32
    %c0_i32_0 = arith.constant 0 : i32
    %c0_i32_1 = arith.constant 0 : i32
    return %c0_i32, %c0_i32_0 : i32, i32
  }
  func.func @transform_8(%arg0: i32) -> (i32, i32) {
    %c0_i32 = arith.constant 0 : i32
    %c0_i32_0 = arith.constant 0 : i32
    %c0_i32_1 = arith.constant 0 : i32
    return %c0_i32, %c0_i32_0 : i32, i32
  }
  func.func @transform_9(%arg0: i32) -> (i32, i32) {
    %c0_i32 = arith.constant 0 : i32
    %c0_i32_0 = arith.constant 0 : i32
    %c0_i32_1 = arith.constant 0 : i32
    return %c0_i32, %c0_i32_0 : i32, i32
  }
  func.func @transform_10(%arg0: i32) -> (i32, i32) {
    %c0_i32 = arith.constant 0 : i32
    %c0_i32_0 = arith.constant 0 : i32
    %c0_i32_1 = arith.constant 0 : i32
    return %c0_i32, %c0_i32_0 : i32, i32
  }
  func.func @transform_11(%arg0: i32) -> (i32, i32) {
    %c0_i32 = arith.constant 0 : i32
    %c0_i32_0 = arith.constant 0 : i32
    %c0_i32_1 = arith.constant 0 : i32
    return %c0_i32, %c0_i32_0 : i32, i32
  }
  func.func @transform_12(%arg0: i32) -> (i32, i32) {
    %c0_i32 = arith.constant 0 : i32
    %c0_i32_0 = arith.constant 0 : i32
    %c0_i32_1 = arith.constant 0 : i32
    return %c0_i32, %c0_i32_0 : i32, i32
  }
  func.func @transform_13(%arg0: i32) -> (i32, i32) {
    %c0_i32 = arith.constant 0 : i32
    %c0_i32_0 = arith.constant 0 : i32
    %c0_i32_1 = arith.constant 0 : i32
    return %c0_i32, %c0_i32_0 : i32, i32
  }
  func.func @transform_14(%arg0: i32) -> (i32, i32) {
    %c0_i32 = arith.constant 0 : i32
    %c0_i32_0 = arith.constant 0 : i32
    %c0_i32_1 = arith.constant 0 : i32
    return %c0_i32, %c0_i32_0 : i32, i32
  }
  func.func @transform_15(%arg0: i32) -> (i32, i32) {
    %c0_i32 = arith.constant 0 : i32
    %c0_i32_0 = arith.constant 0 : i32
    return %arg0, %c0_i32 : i32, i32
  }
}

</mosaic_0001>

<llo_original>
// kernel: scorenet_forward.1
$region0: #{scorenet_forward.1}
  #allocation0 [shape = 'u32[]', space=smem, size = 0x4, offset = 0x4, fixed_abs, tag = 'smem constant byte address 0x4 - core index']
  #allocation1 [shape = 'u32[72,128]{1,0:T(1,128)}', space=vmem, size = 0x9000, scoped, tag = 'internal scratch']
  #allocation2 [shape = 'f32[1,1]{1,0:T(1,128)S(1)}', space=vmem, size = 0x200, scoped, tag = 'scoped memory for scorenet_forward.1']
  %s0 = inlined_call_operand.vmem [shape: f32[8,1], index: 0, kind: input, shape index: {}]
  %s1 = inlined_call_operand.vmem [shape: f32[8,1], index: 1, kind: input, shape index: {}]
  %s2 = inlined_call_operand.vmem [shape: f32[1,16], index: 2, kind: input, shape index: {}]
  %s3 = inlined_call_operand.vmem [shape: f32[1,16], index: 3, kind: input, shape index: {}]
  %s4 = inlined_call_operand.vmem [shape: f32[16,16], index: 4, kind: input, shape index: {}]
  %s5 = inlined_call_operand.vmem [shape: f32[1,16], index: 5, kind: input, shape index: {}]
  %s6 = inlined_call_operand.vmem [shape: f32[1,128], index: 6, kind: input, shape index: {}]
  %s7 = inlined_call_operand.vmem [shape: bf16[16,128], index: 7, kind: input, shape index: {}]
  %s8 = inlined_call_operand.vmem [shape: f32[1,128], index: 8, kind: input, shape index: {}]
  %s9 = inlined_call_operand.vmem [shape: bf16[128,128], index: 9, kind: input, shape index: {}]
  %s10 = inlined_call_operand.hbm [shape: f32[1,128], index: 10, kind: input, shape index: {}]
  %s11 = inlined_call_operand.hbm [shape: bf16[128,128], index: 11, kind: input, shape index: {}]
  %s12 = inlined_call_operand.hbm [shape: f32[1,128], index: 12, kind: input, shape index: {}]
  %s13 = inlined_call_operand.vmem [shape: bf16[128,1], index: 13, kind: input, shape index: {}]
  %s14 = inlined_call_operand.<no memory space> [shape: f32[1,1], index: 14, kind: input, shape index: {}]
  %s15 = inlined_call_operand.vmem [shape: f32[8,1], index: 15, kind: output, shape index: {}]
  %s16 = sld [smem:[#allocation0]]
  $region82: #{scorenet_forward.1} parent=0
    _
  %s18 = ssub.s32 1, %s16
  %s19 = scalar_select 0, %s18, %s16
  %v20 = vstv %s14
  %21 = vst [vmem:[#allocation2] sm:$0x1] %v20
  $region1: #{scorenet_forward.1} parent=0
    #allocation3 [shape = 'u8[512]{0}', space=vmem, size = 0x400, scoped, tag = 'input window, operand 10, single buffered']
    #allocation4 [shape = 's32[1]{0}', space=sflag, size = 0x4, scoped, tag = 'scoped memory for scorenet_forward.1']
    #allocation5 [shape = 'u8[32768]{0}', space=vmem, size = 0x8000, scoped, tag = 'input window, operand 11, single buffered']
    #allocation6 [shape = 's32[1]{0}', space=sflag, size = 0x4, scoped, tag = 'scoped memory for scorenet_forward.1']
    #allocation7 [shape = 'u8[512]{0}', space=vmem, size = 0x400, scoped, tag = 'input window, operand 12, single buffered']
    %22 = vsyncpa [#allocation4], 0
    %23 = vsyncpa [#allocation6], 0
    // Predicated region
    $region2: #{scorenet_forward.1} parent=1 // pred_check
      _
    $region3: #{scorenet_forward.1} parent=1 // pred_check_branch
      %25 = sbr.rel (0) target = $region5
    $region4: #{scorenet_forward.1} parent=1 // pred_region
      _
    $region5: #{scorenet_forward.1} parent=1 // pred_fallthru
      _
    // Predicated region
    $region6: #{scorenet_forward.1} parent=1 // pred_check
      _
    $region7: #{scorenet_forward.1} parent=1 // pred_check_branch
      %27 = sbr.rel (0) target = $region9
    $region8: #{scorenet_forward.1} parent=1 // pred_region
      _
    $region9: #{scorenet_forward.1} parent=1 // pred_fallthru
      _
    // Predicated region
    $region10: #{scorenet_forward.1} parent=1 // pred_check
      _
    $region11: #{scorenet_forward.1} parent=1 // pred_check_branch
      %29 = sbr.rel (0) target = $region13
    $region12: #{scorenet_forward.1} parent=1 // pred_region
      _
    $region13: #{scorenet_forward.1} parent=1 // pred_fallthru
      _
    // Predicated region
    $region14: #{scorenet_forward.1} parent=1 // pred_check
      _
    $region15: #{scorenet_forward.1} parent=1 // pred_check_branch
      %31 = sbr.rel (0) target = $region17
    $region16: #{scorenet_forward.1} parent=1 // pred_region
      _
    $region17: #{scorenet_forward.1} parent=1 // pred_fallthru
      _
    // Predicated region
    $region18: #{scorenet_forward.1} parent=1 // pred_check
      _
    $region19: #{scorenet_forward.1} parent=1 // pred_check_branch
      %33 = sbr.rel (0) target = $region21
    $region20: #{scorenet_forward.1} parent=1 // pred_region
      _
    $region21: #{scorenet_forward.1} parent=1 // pred_fallthru
      _
    // Predicated region
    $region22: #{scorenet_forward.1} parent=1 // pred_check
      _
    $region23: #{scorenet_forward.1} parent=1 // pred_check_branch
      %35 = sbr.rel (0) target = $region25
    $region24: #{scorenet_forward.1} parent=1 // pred_region
      _
    $region25: #{scorenet_forward.1} parent=1 // pred_fallthru
      _
    // Predicated region
    $region26: #{scorenet_forward.1} parent=1 // pred_check
      _
    $region27: #{scorenet_forward.1} parent=1 // pred_check_branch
      %37 = sbr.rel (0) target = $region29
    $region28: #{scorenet_forward.1} parent=1 // pred_region
      _
    $region29: #{scorenet_forward.1} parent=1 // pred_fallthru
      _
    // Predicated region
    $region30: #{scorenet_forward.1} parent=1 // pred_check
      _
    $region31: #{scorenet_forward.1} parent=1 // pred_check_branch
      %39 = sbr.rel (0) target = $region33
    $region32: #{scorenet_forward.1} parent=1 // pred_region
      _
    $region33: #{scorenet_forward.1} parent=1 // pred_fallthru
      _
    // Predicated region
    $region34: #{scorenet_forward.1} parent=1 // pred_check
      _
    $region35: #{scorenet_forward.1} parent=1 // pred_check_branch
      %41 = sbr.rel (0) target = $region37
    $region36: #{scorenet_forward.1} parent=1 // pred_region
      _
    $region37: #{scorenet_forward.1} parent=1 // pred_fallthru
      _
    // Predicated region
    $region38: #{scorenet_forward.1} parent=1 // pred_check
      _
    $region39: #{scorenet_forward.1} parent=1 // pred_check_branch
      %43 = sbr.rel (0) target = $region41
    $region40: #{scorenet_forward.1} parent=1 // pred_region
      _
    $region41: #{scorenet_forward.1} parent=1 // pred_fallthru
      _
    // Predicated region
    $region42: #{scorenet_forward.1} parent=1 // pred_check
      _
    $region43: #{scorenet_forward.1} parent=1 // pred_check_branch
      %45 = sbr.rel (0) target = $region45
    $region44: #{scorenet_forward.1} parent=1 // pred_region
      %47 = vsyncadd [#allocation4], 0
      %s49 = sshll.u32 %s10, 4
      %s50 = int_to_ptr.hbm [resolvable:$true] %s49
      %s51 = sshll.u32 [#allocation3], 4
      %s52 = int_to_ptr.vmem [resolvable:$true] %s51
      %54 = dma.hbm_to_vmem [thread:$0]  %s50, 16, %s52, [#allocation4]
    $region45: #{scorenet_forward.1} parent=1 // pred_fallthru
      _
    // Predicated region
    $region46: #{scorenet_forward.1} parent=1 // pred_check
      _
    $region47: #{scorenet_forward.1} parent=1 // pred_check_branch
      %56 = sbr.rel (0) target = $region49
    $region48: #{scorenet_forward.1} parent=1 // pred_region
      %58 = vsyncadd [#allocation6], 0
      %s59 = sshll.u32 %s11, 4
      %s60 = int_to_ptr.hbm [resolvable:$true] %s59
      %s61 = sshll.u32 [#allocation5], 4
      %s62 = int_to_ptr.vmem [resolvable:$true] %s61
      %67 = dma.hbm_to_vmem [thread:$0]  %s60, 1024, %s62, [#allocation6], 64, 64, 4
    $region49: #{scorenet_forward.1} parent=1 // pred_fallthru
      _
    // Predicated region
    $region50: #{scorenet_forward.1} parent=1 // pred_check
      _
    $region51: #{scorenet_forward.1} parent=1 // pred_check_branch
      %69 = sbr.rel (0) target = $region53
    $region52: #{scorenet_forward.1} parent=1 // pred_region
      %71 = vsyncadd [#allocation6], 0
      %s73 = sshll.u32 %s12, 4
      %s74 = int_to_ptr.hbm [resolvable:$true] %s73
      %s75 = sshll.u32 [#allocation7], 4
      %s76 = int_to_ptr.vmem [resolvable:$true] %s75
      %78 = dma.hbm_to_vmem [thread:$0]  %s74, 16, %s76, [#allocation6]
    $region53: #{scorenet_forward.1} parent=1 // pred_fallthru
      _
    // Predicated region
    $region54: #{scorenet_forward.1} parent=1 // pred_check
      _
    $region55: #{scorenet_forward.1} parent=1 // pred_check_branch
      %80 = sbr.rel (0) target = $region57
    $region56: #{scorenet_forward.1} parent=1 // pred_region
      _
    $region57: #{scorenet_forward.1} parent=1 // pred_fallthru
      _
    // Predicated region
    $region58: #{scorenet_forward.1} parent=1 // pred_check
      _
    $region59: #{scorenet_forward.1} parent=1 // pred_check_branch
      %82 = sbr.rel (0) target = $region61
    $region60: #{scorenet_forward.1} parent=1 // pred_region
      _
    $region61: #{scorenet_forward.1} parent=1 // pred_fallthru
      _
    // Predicated region
    $region62: #{scorenet_forward.1} parent=1 // pred_check
      _
    $region63: #{scorenet_forward.1} parent=1 // pred_check_branch
      %84 = sbr.rel (0) target = $region65
    $region64: #{scorenet_forward.1} parent=1 // pred_region
      %86 = dma.done [#allocation4], 16
    $region65: #{scorenet_forward.1} parent=1 // pred_fallthru
      _
    // Predicated region
    $region66: #{scorenet_forward.1} parent=1 // pred_check
      _
    $region67: #{scorenet_forward.1} parent=1 // pred_check_branch
      %88 = sbr.rel (0) target = $region69
    $region68: #{scorenet_forward.1} parent=1 // pred_region
      %90 = dma.done [#allocation6], 1024
    $region69: #{scorenet_forward.1} parent=1 // pred_fallthru
      _
    // Predicated region
    $region70: #{scorenet_forward.1} parent=1 // pred_check
      _
    $region71: #{scorenet_forward.1} parent=1 // pred_check_branch
      %92 = sbr.rel (0) target = $region73
    $region72: #{scorenet_forward.1} parent=1 // pred_region
      %94 = dma.done [#allocation6], 16
    $region73: #{scorenet_forward.1} parent=1 // pred_fallthru
      _
    %v96 = vld [vmem:[%s0] sm:$0xff]
    %v97 = vld [vmem:[%s1] sm:$0xff]
    %v98 = vld [vmem:[%s2] sm:$0x1]
    %100 = vset.pattern.permute.xlu0 0
    %101 = vperm.xlu0 %100, %v97
    %v102 = vpop.permute.xlu0 %101
    %v105 = vperm.slane %v98, 0
    %v107 = vmul.f32 %v102, %v105
    %v108 = vld [vmem:[%s3] sm:$0x1]
    %v110 = vperm.slane %v108, 0
    %v112 = vadd.f32 %v107, %v110
    %v113 = vmax.f32 %v112, 0.0
    %v114 = vld [vmem:[%s4] sm:$0xff]
    %v115 = vld [vmem:[%s4 + $0x8] sm:$0xff]
    %v116 = vld [vmem:[%s5] sm:$0x1]
    %v118 = vperm.slane %v116, 0
    %vm120 = vcmask 130048
    %v122 = vsel %vm120, %v113, 0
    %124 = vmatpush.msra.mxu0 0.0
    %125 = vmatpush.msra.mxu0 0.0
    %126 = vmatpush.msra.mxu0 0.0
    %127 = vmatpush.msra.mxu0 0.0
    %128 = vmatpush.msra.mxu0 0.0
    %129 = vmatpush.msra.mxu0 0.0
    %130 = vmatpush.msra.mxu0 0.0
    %131 = vmatpush.msra.mxu0 0.0
    %132 = vmatpush.msra.mxu0 0.0
    %133 = vmatpush.msra.mxu0 0.0
    %134 = vmatpush.msra.mxu0 0.0
    %135 = vmatpush.msra.mxu0 0.0
    %136 = vmatpush.msra.mxu0 0.0
    %137 = vmatpush.msra.mxu0 0.0
    %138 = vmatpush.msra.mxu0 %v115
    %139 = vmatpush.msra.mxu0 %v114
    %140 = vmatmul.f32.gmra.mxu0 %v122
    %v141 = vpop.f32.mrf.mxu0
    %v142 = vadd.f32 %v118, %v141
    %143 = vdwg.mxu0
    %v144 = vmax.f32 %v142, 0.0
    %v145 = vld [vmem:[%s6] sm:$0x1]
    %147 = vset.pattern.permute.xlu0 0
    %148 = vperm.xlu0 %147, %v96
    %v149 = vpop.permute.xlu0 %148
    %v152 = vperm.slane %v145, 0
    %v154 = vmul.f32 %v149, %v152
    %v155 = vpack.c.bf16 %v144, %v144
    %v156 = vld [vmem:[%s7] sm:$0xf]
    %v157 = vld [vmem:[%s7 + $0x4] sm:$0xf]
    %v160 = vunpack.c.l.b16 %v156
    %v161 = vunpack.c.l.b16 %v157
    %v162 = vpack.c.b16 %v161, %v160
    %v165 = vsel %vm120, %v155, 0
    %167 = vmatpush.bf16.msra.mxu0 0
    %168 = vmatpush.bf16.msra.mxu0 0
    %169 = vmatpush.bf16.msra.mxu0 0
    %170 = vmatpush.bf16.msra.mxu0 0
    %171 = vmatpush.bf16.msra.mxu0 0
    %172 = vmatpush.bf16.msra.mxu0 0
    %173 = vmatpush.bf16.msra.mxu0 0
    %174 = vmatpush.bf16.msra.mxu0 %v162
    %175 = vmatmul.bf16.gmra.mxu0 %v165
    %v176 = vpop.f32.mrf.mxu0
    %v177 = vadd.f32 0.0, %v176
    %v178 = vpop.f32.mrf.mxu0
    %179 = vdwg.mxu0
    %v180 = vadd.f32 %v154, %v177
    %v181 = vld [vmem:[%s8] sm:$0x1]
    %v183 = vperm.slane %v181, 0
    %v185 = vadd.f32 %v180, %v183
    %v186 = vmax.f32 %v185, 0.0
    %v187 = vpack.c.bf16 %v186, %v186
    %v188 = vld [vmem:[%s9] sm:$0xf]
    %v189 = vld [vmem:[%s9 + $0x4] sm:$0xf]
    %v190 = vld [vmem:[%s9 + $0x8] sm:$0xf]
    %v191 = vld [vmem:[%s9 + $0xc] sm:$0xf]
    %v192 = vld [vmem:[%s9 + $0x10] sm:$0xf]
    %v193 = vld [vmem:[%s9 + $0x14] sm:$0xf]
    %v194 = vld [vmem:[%s9 + $0x18] sm:$0xf]
    %v195 = vld [vmem:[%s9 + $0x1c] sm:$0xf]
    %v196 = vld [vmem:[%s9 + $0x20] sm:$0xf]
    %v197 = vld [vmem:[%s9 + $0x24] sm:$0xf]
    %v198 = vld [vmem:[%s9 + $0x28] sm:$0xf]
    %v199 = vld [vmem:[%s9 + $0x2c] sm:$0xf]
    %v200 = vld [vmem:[%s9 + $0x30] sm:$0xf]
    %v201 = vld [vmem:[%s9 + $0x34] sm:$0xf]
    %v202 = vld [vmem:[%s9 + $0x38] sm:$0xf]
    %v203 = vld [vmem:[%s9 + $0x3c] sm:$0xf]
    %v204 = vld [vmem:[#allocation3] sm:$0x1]
    %v206 = vperm.slane %v204, 0
    %v224 = vunpack.c.l.b16 %v188
    %v225 = vunpack.c.l.b16 %v189
    %v226 = vunpack.c.l.b16 %v190
    %v227 = vunpack.c.l.b16 %v191
    %v228 = vunpack.c.l.b16 %v192
    %v229 = vunpack.c.l.b16 %v193
    %v230 = vunpack.c.l.b16 %v194
    %v231 = vunpack.c.l.b16 %v195
    %v232 = vunpack.c.l.b16 %v196
    %v233 = vunpack.c.l.b16 %v197
    %v234 = vunpack.c.l.b16 %v198
    %v235 = vunpack.c.l.b16 %v199
    %v236 = vunpack.c.l.b16 %v200
    %v237 = vunpack.c.l.b16 %v201
    %v238 = vunpack.c.l.b16 %v202
    %v239 = vunpack.c.l.b16 %v203
    %v240 = vpack.c.b16 %v225, %v224
    %v241 = vpack.c.b16 %v227, %v226
    %v242 = vpack.c.b16 %v229, %v228
    %v243 = vpack.c.b16 %v231, %v230
    %v244 = vpack.c.b16 %v233, %v232
    %v245 = vpack.c.b16 %v235, %v234
    %v246 = vpack.c.b16 %v237, %v236
    %v247 = vpack.c.b16 %v239, %v238
    %256 = vmatpush.bf16.msra.mxu0 %v247
    %257 = vmatpush.bf16.msra.mxu0 %v246
    %258 = vmatpush.bf16.msra.mxu0 %v245
    %259 = vmatpush.bf16.msra.mxu0 %v244
    %260 = vmatpush.bf16.msra.mxu0 %v243
    %261 = vmatpush.bf16.msra.mxu0 %v242
    %262 = vmatpush.bf16.msra.mxu0 %v241
    %263 = vmatpush.bf16.msra.mxu0 %v240
    %264 = vmatmul.bf16.gmra.mxu0 %v187
    %v265 = vpop.f32.mrf.mxu0
    %v266 = vadd.f32 %v206, %v265
    %v267 = vpop.f32.mrf.mxu0
    %268 = vdwg.mxu0
    %v269 = vmax.f32 %v266, 0.0
    %v270 = vpack.c.bf16 %v269, %v269
    %v271 = vld [vmem:[#allocation5] sm:$0xf]
    %v272 = vld [vmem:[#allocation5 + $0x4] sm:$0xf]
    %v273 = vld [vmem:[#allocation5 + $0x8] sm:$0xf]
    %v274 = vld [vmem:[#allocation5 + $0xc] sm:$0xf]
    %v275 = vld [vmem:[#allocation5 + $0x10] sm:$0xf]
    %v276 = vld [vmem:[#allocation5 + $0x14] sm:$0xf]
    %v277 = vld [vmem:[#allocation5 + $0x18] sm:$0xf]
    %v278 = vld [vmem:[#allocation5 + $0x1c] sm:$0xf]
    %v279 = vld [vmem:[#allocation5 + $0x20] sm:$0xf]
    %v280 = vld [vmem:[#allocation5 + $0x24] sm:$0xf]
    %v281 = vld [vmem:[#allocation5 + $0x28] sm:$0xf]
    %v282 = vld [vmem:[#allocation5 + $0x2c] sm:$0xf]
    %v283 = vld [vmem:[#allocation5 + $0x30] sm:$0xf]
    %v284 = vld [vmem:[#allocation5 + $0x34] sm:$0xf]
    %v285 = vld [vmem:[#allocation5 + $0x38] sm:$0xf]
    %v286 = vld [vmem:[#allocation5 + $0x3c] sm:$0xf]
    %v287 = vld [vmem:[#allocation7] sm:$0x1]
    %v289 = vperm.slane %v287, 0
    %v307 = vunpack.c.l.b16 %v271
    %v308 = vunpack.c.l.b16 %v272
    %v309 = vunpack.c.l.b16 %v273
    %v310 = vunpack.c.l.b16 %v274
    %v311 = vunpack.c.l.b16 %v275
    %v312 = vunpack.c.l.b16 %v276
    %v313 = vunpack.c.l.b16 %v277
    %v314 = vunpack.c.l.b16 %v278
    %v315 = vunpack.c.l.b16 %v279
    %v316 = vunpack.c.l.b16 %v280
    %v317 = vunpack.c.l.b16 %v281
    %v318 = vunpack.c.l.b16 %v282
    %v319 = vunpack.c.l.b16 %v283
    %v320 = vunpack.c.l.b16 %v284
    %v321 = vunpack.c.l.b16 %v285
    %v322 = vunpack.c.l.b16 %v286
    %v323 = vpack.c.b16 %v308, %v307
    %v324 = vpack.c.b16 %v310, %v309
    %v325 = vpack.c.b16 %v312, %v311
    %v326 = vpack.c.b16 %v314, %v313
    %v327 = vpack.c.b16 %v316, %v315
    %v328 = vpack.c.b16 %v318, %v317
    %v329 = vpack.c.b16 %v320, %v319
    %v330 = vpack.c.b16 %v322, %v321
    %339 = vmatpush.bf16.msra.mxu0 %v330
    %340 = vmatpush.bf16.msra.mxu0 %v329
    %341 = vmatpush.bf16.msra.mxu0 %v328
    %342 = vmatpush.bf16.msra.mxu0 %v327
    %343 = vmatpush.bf16.msra.mxu0 %v326
    %344 = vmatpush.bf16.msra.mxu0 %v325
    %345 = vmatpush.bf16.msra.mxu0 %v324
    %346 = vmatpush.bf16.msra.mxu0 %v323
    %347 = vmatmul.bf16.gmra.mxu0 %v270
    %v348 = vpop.f32.mrf.mxu0
    %v349 = vadd.f32 %v289, %v348
    %v350 = vpop.f32.mrf.mxu0
    %351 = vdwg.mxu0
    %v352 = vmax.f32 %v349, 0.0
    %v353 = vpack.c.bf16 %v352, %v352
    %v354 = vld [vmem:[%s13] sm:$0xf]
    %v355 = vld [vmem:[%s13 + $0x4] sm:$0xf]
    %v356 = vld [vmem:[%s13 + $0x8] sm:$0xf]
    %v357 = vld [vmem:[%s13 + $0xc] sm:$0xf]
    %v358 = vld [vmem:[%s13 + $0x10] sm:$0xf]
    %v359 = vld [vmem:[%s13 + $0x14] sm:$0xf]
    %v360 = vld [vmem:[%s13 + $0x18] sm:$0xf]
    %v361 = vld [vmem:[%s13 + $0x1c] sm:$0xf]
    %v362 = vld [vmem:[%s13 + $0x20] sm:$0xf]
    %v363 = vld [vmem:[%s13 + $0x24] sm:$0xf]
    %v364 = vld [vmem:[%s13 + $0x28] sm:$0xf]
    %v365 = vld [vmem:[%s13 + $0x2c] sm:$0xf]
    %v366 = vld [vmem:[%s13 + $0x30] sm:$0xf]
    %v367 = vld [vmem:[%s13 + $0x34] sm:$0xf]
    %v368 = vld [vmem:[%s13 + $0x38] sm:$0xf]
    %v369 = vld [vmem:[%s13 + $0x3c] sm:$0xf]
    %v370 = vld [vmem:[#allocation2] sm:$0x1]
    %v372 = vperm.slane %v370, 0
    %v390 = vunpack.c.l.b16 %v354
    %v391 = vunpack.c.l.b16 %v355
    %v392 = vunpack.c.l.b16 %v356
    %v393 = vunpack.c.l.b16 %v357
    %v394 = vunpack.c.l.b16 %v358
    %v395 = vunpack.c.l.b16 %v359
    %v396 = vunpack.c.l.b16 %v360
    %v397 = vunpack.c.l.b16 %v361
    %v398 = vunpack.c.l.b16 %v362
    %v399 = vunpack.c.l.b16 %v363
    %v400 = vunpack.c.l.b16 %v364
    %v401 = vunpack.c.l.b16 %v365
    %v402 = vunpack.c.l.b16 %v366
    %v403 = vunpack.c.l.b16 %v367
    %v404 = vunpack.c.l.b16 %v368
    %v405 = vunpack.c.l.b16 %v369
    %v406 = vpack.c.b16 %v391, %v390
    %v407 = vpack.c.b16 %v393, %v392
    %v408 = vpack.c.b16 %v395, %v394
    %v409 = vpack.c.b16 %v397, %v396
    %v410 = vpack.c.b16 %v399, %v398
    %v411 = vpack.c.b16 %v401, %v400
    %v412 = vpack.c.b16 %v403, %v402
    %v413 = vpack.c.b16 %v405, %v404
    %422 = vmatpush.bf16.msra.mxu0 %v413
    %423 = vmatpush.bf16.msra.mxu0 %v412
    %424 = vmatpush.bf16.msra.mxu0 %v411
    %425 = vmatpush.bf16.msra.mxu0 %v410
    %426 = vmatpush.bf16.msra.mxu0 %v409
    %427 = vmatpush.bf16.msra.mxu0 %v408
    %428 = vmatpush.bf16.msra.mxu0 %v407
    %429 = vmatpush.bf16.msra.mxu0 %v406
    %430 = vmatmul.bf16.gmra.mxu0 %v353
    %v431 = vpop.f32.mrf.mxu0
    %v432 = vadd.f32 %v372, %v431
    %v433 = vpop.f32.mrf.mxu0
    %434 = vdwg.mxu0
    %vm435 = vcmask 7168
    %436 = vst.msk [vmem:[%s15] sm:$0xff] %vm435, %v432
    // Predicated region
    $region74: #{scorenet_forward.1} parent=1 // pred_check
      _
    $region75: #{scorenet_forward.1} parent=1 // pred_check_branch
      %438 = sbr.rel (0) target = $region77
    $region76: #{scorenet_forward.1} parent=1 // pred_region
      _
    $region77: #{scorenet_forward.1} parent=1 // pred_fallthru
      _
    // Predicated region
    $region78: #{scorenet_forward.1} parent=1 // pred_check
      _
    $region79: #{scorenet_forward.1} parent=1 // pred_check_branch
      %440 = sbr.rel (0) target = $region81
    $region80: #{scorenet_forward.1} parent=1 // pred_region
      _
    $region81: #{scorenet_forward.1} parent=1 // pred_fallthru
      _
    %441 = vsyncpa [#allocation4], 1
    %442 = vsyncpa [#allocation6], 1

</llo_original>
